<compile_context>
chip_gen: v5e
topology: v5e:2x2
jax: 0.10.0
libtpu: 0.0.40
codegen_flags: <defaults>
</compile_context>

<pallas_src>
import jax
import jax.numpy as jnp
from jax.experimental import pallas as pl
from jax.experimental.pallas import tpu as pltpu


KH, SH, SW = 10, 2, 15          # Conv2d(kernel_size=(10, 1), stride=(2, 15))
BN_EPS = 1e-5


# ----------------------------------------------------------------------------
# Fused kernel: im2col'd conv matmul + folded BN + ReLU + SE gate + scale.
# One grid step = one batch element; everything stays in VMEM.
# ----------------------------------------------------------------------------
def _freq_conv_block_kernel(p_ref, w_ref, shift_ref, w1_ref, w2_ref, o_ref):
    # p_ref:     (1, P, KH*C_in)   im2col patches for this batch element
    # w_ref:     (KH*C_in, C_out)  conv weight with BN scale folded in
    # shift_ref: (1, C_out)        conv bias + BN shift folded together
    # w1_ref:    (C_out, hid)      SE fc1 weight (transposed, no bias)
    # w2_ref:    (hid, C_out)      SE fc2 weight (transposed, no bias)
    # o_ref:     (1, P, C_out)
    patches = p_ref[0]                                           # (P, K)
    y = jnp.dot(patches, w_ref[...], preferred_element_type=jnp.float32)
    y = y + shift_ref[...]                                       # conv bias + BN
    # Dropout(0.25) is identity in eval mode.
    y = jnp.maximum(y, 0.0)                                      # ReLU

    # SEBlock: global average pool -> fc1 -> ReLU -> fc2 -> sigmoid -> scale.
    pooled = jnp.mean(y, axis=0, keepdims=True)                  # (1, C_out)
    h1 = jnp.maximum(
        jnp.dot(pooled, w1_ref[...], preferred_element_type=jnp.float32), 0.0)
    gate = jax.nn.sigmoid(
        jnp.dot(h1, w2_ref[...], preferred_element_type=jnp.float32))  # (1, C_out)

    o_ref[0] = (y * gate).astype(o_ref.dtype)


# ----------------------------------------------------------------------------
# Wrapper: NCHW in / NCHW out, matching the PyTorch module interface.
# ----------------------------------------------------------------------------
def freq_conv_block(x_nchw, params):
    B, C_in, H, W = x_nchw.shape
    w2d, shift, w1, w2 = params["w2d"], params["shift"], params["w1"], params["w2"]
    C_out = w2d.shape[1]
    hid = w1.shape[1]
    H_out = (H - KH) // SH + 1
    W_out = (W - 1) // SW + 1
    P = H_out * W_out
    K = KH * C_in

    # NCHW -> NHWC, keeping only every SW-th column (the kernel is 1-wide in W,
    # so the stride-15 conv never touches the other 14/15 of the input bytes).
    x = jnp.transpose(x_nchw, (0, 2, 3, 1))[:, :, ::SW, :]       # (B, H, W_out, C_in)

    # im2col along H (stride 2, kernel height 10): row indices 2*h' + ky.
    hidx = SH * jnp.arange(H_out)[:, None] + jnp.arange(KH)[None, :]   # (H_out, KH)
    patches = jnp.take(x, hidx, axis=1)                   # (B, H_out, KH, W_out, C_in)
    patches = jnp.transpose(patches, (0, 1, 3, 2, 4)).reshape(B, P, K)

    out = pl.pallas_call(
        _freq_conv_block_kernel,
        out_shape=jax.ShapeDtypeStruct((B, P, C_out), x_nchw.dtype),
        grid=(B,),
        in_specs=[
            pl.BlockSpec((1, P, K), lambda b: (b, 0, 0)),
            pl.BlockSpec((K, C_out), lambda b: (0, 0)),
            pl.BlockSpec((1, C_out), lambda b: (0, 0)),
            pl.BlockSpec((C_out, hid), lambda b: (0, 0)),
            pl.BlockSpec((hid, C_out), lambda b: (0, 0)),
        ],
        out_specs=pl.BlockSpec((1, P, C_out), lambda b: (b, 0, 0)),
        compiler_params=pltpu.CompilerParams(
            dimension_semantics=("parallel",)),
    )(patches, w2d, shift, w1, w2)

    # (B, H_out*W_out, C_out) -> NCHW to match the PyTorch interface.
    return jnp.transpose(out.reshape(B, H_out, W_out, C_out), (0, 3, 1, 2))


# ----------------------------------------------------------------------------
# Deterministic parameter construction (PyTorch layouts, then kernel re-layout).
# ----------------------------------------------------------------------------
def make_params(key, C_in, C_out, reduction=16):
    hid = C_out // reduction
    ks = jax.random.split(key, 8)
    conv_w = 0.1 * jax.random.normal(ks[0], (C_out, C_in, KH, 1), jnp.float32)
    conv_b = 0.1 * jax.random.normal(ks[1], (C_out,), jnp.float32)
    gamma = 1.0 + 0.1 * jax.random.normal(ks[2], (C_out,), jnp.float32)
    beta = 0.1 * jax.random.normal(ks[3], (C_out,), jnp.float32)
    r_mean = 0.1 * jax.random.normal(ks[4], (C_out,), jnp.float32)
    r_var = jax.random.uniform(ks[5], (C_out,), jnp.float32, 0.5, 1.5)
    W1 = 0.2 * jax.random.normal(ks[6], (hid, C_out), jnp.float32)  # Linear(C_out, hid)
    W2 = 0.2 * jax.random.normal(ks[7], (C_out, hid), jnp.float32)  # Linear(hid, C_out)

    # Fold BN (inference) scale into the conv weight, and conv bias + BN shift
    # into one per-channel shift vector.
    scale = gamma / jnp.sqrt(r_var + BN_EPS)                        # (C_out,)
    # patch flattening order is (ky, ci) -> weight layout [ky*C_in + ci, co]
    w2d = (jnp.transpose(conv_w[:, :, :, 0], (2, 1, 0)).reshape(KH * C_in, C_out)
           * scale[None, :])
    shift = ((conv_b - r_mean) * scale + beta).reshape(1, C_out)

    params = dict(w2d=w2d, shift=shift, w1=W1.T, w2=W2.T)
    raw = dict(conv_w=conv_w, conv_b=conv_b, gamma=gamma, beta=beta,
               r_mean=r_mean, r_var=r_var, W1=W1, W2=W2)
    return params, raw


# ----------------------------------------------------------------------------
# Pure-JAX (lax.conv) reference matching the PyTorch forward, for verification.
# ----------------------------------------------------------------------------
def freq_conv_block_ref(x, raw):
    y = jax.lax.conv_general_dilated(
        x, raw["conv_w"], (SH, SW), "VALID",
        dimension_numbers=("NCHW", "OIHW", "NCHW"))
    y = y + raw["conv_b"][None, :, None, None]
    y = ((y - raw["r_mean"][None, :, None, None])
         / jnp.sqrt(raw["r_var"] + BN_EPS)[None, :, None, None]
         * raw["gamma"][None, :, None, None]
         + raw["beta"][None, :, None, None])
    y = jax.nn.relu(y)                                   # dropout = identity (eval)
    pooled = y.mean(axis=(2, 3))                         # (B, C_out)
    g = jax.nn.sigmoid(jax.nn.relu(pooled @ raw["W1"].T) @ raw["W2"].T)
    return y * g[:, :, None, None]


if __name__ == "__main__":
    B, C_in, H, W = 4, 4, 64, 61
    C_out = 128                                          # lane-dense channel width
    key = jax.random.PRNGKey(0)
    kx, kp = jax.random.split(key)
    x = jax.random.normal(kx, (B, C_in, H, W), jnp.float32)

    params, raw = make_params(kp, C_in, C_out)

    out = jax.block_until_ready(freq_conv_block(x, params))
    ref = jax.block_until_ready(freq_conv_block_ref(x, raw))

    H_out = (H - KH) // SH + 1
    W_out = (W - 1) // SW + 1
    assert out.shape == (B, C_out, H_out, W_out), out.shape
    max_err = float(jnp.max(jnp.abs(out - ref)))
    assert max_err < 2e-3, f"max abs err too large: {max_err}"

    print("KERNEL_OK")
</pallas_src>

<mosaic_0001>
module attributes {stable_mosaic.version = 11 : i64} {
  func.func @_freq_conv_block_kernel(%arg0: i32, %arg1: memref<1x140x40xf32, #tpu.memory_space<vmem>>, %arg2: memref<40x128xf32, #tpu.memory_space<vmem>>, %arg3: memref<1x128xf32, #tpu.memory_space<vmem>>, %arg4: memref<128x8xf32, #tpu.memory_space<vmem>>, %arg5: memref<8x128xf32, #tpu.memory_space<vmem>>, %arg6: memref<1x140x128xf32, #tpu.memory_space<vmem>>) attributes {dimension_semantics = [#tpu.dimension_semantics<parallel>], iteration_bounds = array<i64: 4>, scalar_prefetch = 0 : i64, scratch_operands = 0 : i64, tpu.core_type = #tpu.core_type<tc>, window_params = [{transform_indices = @transform_0, window_bounds = array<i64: 1, 140, 40>}, {pipeline_mode = #tpu.pipeline_mode<synchronous>, transform_indices = @transform_1, window_bounds = array<i64: 40, 128>}, {pipeline_mode = #tpu.pipeline_mode<synchronous>, transform_indices = @transform_2, window_bounds = array<i64: 1, 128>}, {pipeline_mode = #tpu.pipeline_mode<synchronous>, transform_indices = @transform_3, window_bounds = array<i64: 128, 8>}, {pipeline_mode = #tpu.pipeline_mode<synchronous>, transform_indices = @transform_4, window_bounds = array<i64: 8, 128>}, {transform_indices = @transform_5, window_bounds = array<i64: 1, 140, 128>}]} {
    %c0 = arith.constant 0 : index
    %c0_0 = arith.constant 0 : index
    %c0_1 = arith.constant 0 : index
    %0 = vector.load %arg1[%c0, %c0_0, %c0_1] : memref<1x140x40xf32, #tpu.memory_space<vmem>>, vector<1x140x40xf32>
    %1 = vector.shape_cast %0 : vector<1x140x40xf32> to vector<140x40xf32>
    %c0_2 = arith.constant 0 : index
    %c0_3 = arith.constant 0 : index
    %2 = vector.load %arg2[%c0_2, %c0_3] : memref<40x128xf32, #tpu.memory_space<vmem>>, vector<40x128xf32>
    %cst = arith.constant dense<0.000000e+00> : vector<140x128xf32>
    %3 = tpu.matmul %1, %2, %cst {dimension_numbers = #tpu.dot_dimension_numbers<[1], [0], [0], [1], [0, 0, 1, 1], [], []>} : vector<140x40xf32>, vector<40x128xf32>, vector<140x128xf32> -> vector<140x128xf32>
    %c0_4 = arith.constant 0 : index
    %c0_5 = arith.constant 0 : index
    %4 = vector.load %arg3[%c0_4, %c0_5] : memref<1x128xf32, #tpu.memory_space<vmem>>, vector<1x128xf32>
    %5 = vector.broadcast %4 : vector<1x128xf32> to vector<140x128xf32>
    %6 = arith.addf %3, %5 : vector<140x128xf32>
    %cst_6 = arith.constant 0.000000e+00 : f32
    %7 = vector.broadcast %cst_6 : f32 to vector<140x128xf32>
    %8 = arith.maximumf %6, %7 : vector<140x128xf32>
    %cst_7 = arith.constant dense<0.000000e+00> : vector<128xf32>
    %9 = vector.multi_reduction <add>, %8, %cst_7 [0] : vector<140x128xf32> to vector<128xf32>
    %10 = vector.shape_cast %9 : vector<128xf32> to vector<1x128xf32>
    %cst_8 = arith.constant 1.400000e+02 : f32
    %11 = vector.broadcast %cst_8 : f32 to vector<1x128xf32>
    %12 = arith.divf %10, %11 : vector<1x128xf32>
    %c0_9 = arith.constant 0 : index
    %c0_10 = arith.constant 0 : index
    %13 = vector.load %arg4[%c0_9, %c0_10] : memref<128x8xf32, #tpu.memory_space<vmem>>, vector<128x8xf32>
    %cst_11 = arith.constant dense<0.000000e+00> : vector<1x8xf32>
    %14 = tpu.matmul %12, %13, %cst_11 {dimension_numbers = #tpu.dot_dimension_numbers<[1], [0], [0], [1], [0, 0, 1, 1], [], []>} : vector<1x128xf32>, vector<128x8xf32>, vector<1x8xf32> -> vector<1x8xf32>
    %cst_12 = arith.constant 0.000000e+00 : f32
    %15 = vector.broadcast %cst_12 : f32 to vector<1x8xf32>
    %16 = arith.maximumf %14, %15 : vector<1x8xf32>
    %c0_13 = arith.constant 0 : index
    %c0_14 = arith.constant 0 : index
    %17 = vector.load %arg5[%c0_13, %c0_14] : memref<8x128xf32, #tpu.memory_space<vmem>>, vector<8x128xf32>
    %cst_15 = arith.constant dense<0.000000e+00> : vector<1x128xf32>
    %18 = tpu.matmul %16, %17, %cst_15 {dimension_numbers = #tpu.dot_dimension_numbers<[1], [0], [0], [1], [0, 0, 1, 1], [], []>} : vector<1x8xf32>, vector<8x128xf32>, vector<1x128xf32> -> vector<1x128xf32>
    %19 = arith.negf %18 : vector<1x128xf32>
    %20 = math.exp %19 : vector<1x128xf32>
    %cst_16 = arith.constant 1.000000e+00 : f32
    %21 = vector.broadcast %cst_16 : f32 to vector<1x128xf32>
    %22 = arith.addf %21, %20 : vector<1x128xf32>
    %23 = arith.divf %21, %22 : vector<1x128xf32>
    %24 = vector.broadcast %23 : vector<1x128xf32> to vector<140x128xf32>
    %25 = arith.mulf %8, %24 : vector<140x128xf32>
    %c0_17 = arith.constant 0 : index
    %c0_18 = arith.constant 0 : index
    %c0_19 = arith.constant 0 : index
    %26 = vector.load %arg6[%c0_17, %c0_18, %c0_19] : memref<1x140x128xf32, #tpu.memory_space<vmem>>, vector<1x140x128xf32>
    %27 = vector.shape_cast %26 : vector<1x140x128xf32> to vector<140x128xf32>
    %28 = vector.shape_cast %25 : vector<140x128xf32> to vector<1x140x128xf32>
    tpu.vector_store %arg6[%c0_17, %c0_18, %c0_19], %28 {strides = array<i32>} : memref<1x140x128xf32, #tpu.memory_space<vmem>>, vector<1x140x128xf32>,
    return
  }
  func.func @transform_0(%arg0: i32) -> (i32, i32, i32) {
    %c0_i32 = arith.constant 0 : i32
    %c0_i32_0 = arith.constant 0 : i32
    %c0_i32_1 = arith.constant 0 : i32
    return %arg0, %c0_i32, %c0_i32_0 : i32, i32, i32
  }
  func.func @transform_1(%arg0: i32) -> (i32, i32) {
    %c0_i32 = arith.constant 0 : i32
    %c0_i32_0 = arith.constant 0 : i32
    %c0_i32_1 = arith.constant 0 : i32
    return %c0_i32, %c0_i32_0 : i32, i32
  }
  func.func @transform_2(%arg0: i32) -> (i32, i32) {
    %c0_i32 = arith.constant 0 : i32
    %c0_i32_0 = arith.constant 0 : i32
    %c0_i32_1 = arith.constant 0 : i32
    return %c0_i32, %c0_i32_0 : i32, i32
  }
  func.func @transform_3(%arg0: i32) -> (i32, i32) {
    %c0_i32 = arith.constant 0 : i32
    %c0_i32_0 = arith.constant 0 : i32
    %c0_i32_1 = arith.constant 0 : i32
    return %c0_i32, %c0_i32_0 : i32, i32
  }
  func.func @transform_4(%arg0: i32) -> (i32, i32) {
    %c0_i32 = arith.constant 0 : i32
    %c0_i32_0 = arith.constant 0 : i32
    %c0_i32_1 = arith.constant 0 : i32
    return %c0_i32, %c0_i32_0 : i32, i32
  }
  func.func @transform_5(%arg0: i32) -> (i32, i32, i32) {
    %c0_i32 = arith.constant 0 : i32
    %c0_i32_0 = arith.constant 0 : i32
    %c0_i32_1 = arith.constant 0 : i32
    return %arg0, %c0_i32, %c0_i32_0 : i32, i32, i32
  }
}

</mosaic_0001>

<llo_original>
// kernel: tpu_custom_call.1
$region0: #{tpu_custom_call.1}
  #allocation0 [shape = 'u32[]', space=smem, size = 0x4, offset = 0x4, fixed_abs, tag = 'smem constant byte address 0x4 - core index']
  #allocation1 [shape = 'u32[72,128]{1,0:T(1,128)}', space=vmem, size = 0x9000, scoped, tag = 'internal scratch']
  %s0 = inlined_call_operand.vmem [shape: f32[4,140,40], index: 0, kind: input, shape index: {}]
  %s1 = inlined_call_operand.vmem [shape: f32[40,128], index: 1, kind: input, shape index: {}]
  %s2 = inlined_call_operand.vmem [shape: f32[1,128], index: 2, kind: input, shape index: {}]
  %s3 = inlined_call_operand.vmem [shape: f32[128,8], index: 3, kind: input, shape index: {}]
  %s4 = inlined_call_operand.vmem [shape: f32[8,128], index: 4, kind: input, shape index: {}]
  %s5 = inlined_call_operand.vmem [shape: f32[4,140,128], index: 5, kind: output, shape index: {}]
  %s6 = sld [smem:[#allocation0]]
  $region53: #{tpu_custom_call.1} parent=0
    _
  %s8 = ssub.s32 1, %s6
  %s9 = scalar_select 0, %s8, %s6
  loop: start=0, step=1, limit=6
  $region2: #{tpu_custom_call.1} parent=0 // loop_pre_header
    _
  $region3: #{tpu_custom_call.1} parent=0 // loop_header
    %s11 = sphi 0, %s15
    %p12 = scmp.ge.s32.totalorder %s11, 6
    %s21 = sphi 0, %s23
    %s24 = sphi 0, %s21
    %s25 = sphi 0, %s24
    %s41 = sphi 0, %s25
    %s45 = sphi 0, %s45
    %s47 = sphi 0, %s45
    %s48 = sphi 0, %s47
    %s62 = sphi 0, %s48
    %s66 = sphi 0, %s66
    %s68 = sphi 0, %s66
    %s69 = sphi 0, %s68
    %s83 = sphi 0, %s69
    %s87 = sphi 0, %s87
    %s89 = sphi 0, %s87
    %s90 = sphi 0, %s89
    %s104 = sphi 0, %s90
    %s108 = sphi 0, %s108
    %s110 = sphi 0, %s108
    %s111 = sphi 0, %s110
    %s125 = sphi 0, %s111
    %s131 = sphi 0, %s133
    %s134 = sphi 0, %s131
    %s135 = sphi 0, %s134
    %s151 = sphi 0, %s135
  $region4: #{tpu_custom_call.1} parent=0 // loop_header_branch
    %14 = sbr.rel (%p12) target = $region8
  $region5: #{tpu_custom_call.1} parent=0 // loop_body
    %s16 = ssub.s32 %s11, 1
    %s17 = ssub.s32 %s11, 2
    %s18 = sadd.s32 %s11, 1
    %s19 = ssub.s32 %s11, %s18
    %p20 = scmp.eq.s32.totalorder %s19, 0
    %s22 = sadd.s32 %s21, 1
    %s23 = scalar_select %p20, %s21, %s22
    %p26 = pneg %p20
    %p27 = scmp.eq.s32.totalorder %s11, 3
    %p28 = por %p26, %p27
    %p29 = scmp.ne.s32.totalorder %s21, %s24
    %p30 = scmp.eq.s32.totalorder %s11, 0
    %p31 = por %p29, %p30
    %p32 = scmp.ne.s32.totalorder %s21, %s24
    %p33 = scmp.eq.s32.totalorder %s16, 3
    %p34 = por %p32, %p33
    %p35 = scmp.ne.s32.totalorder %s24, %s25
    %p36 = scmp.eq.s32.totalorder %s16, 0
    %p37 = por %p35, %p36
    %p38 = scmp.ne.s32.totalorder %s24, %s25
    %p39 = scmp.eq.s32.totalorder %s17, 3
    %p40 = por %p38, %p39
    %p42 = scmp.ne.s32.totalorder %s25, %s41
    %p43 = scmp.eq.s32.totalorder %s17, 0
    %p44 = por %p42, %p43
    %s46 = sadd.s32 %s45, 1
    %p49 = scmp.eq.s32.totalorder %s11, 3
    %p50 = scmp.ne.s32.totalorder %s45, %s47
    %p51 = scmp.eq.s32.totalorder %s11, 0
    %p52 = por %p50, %p51
    %p53 = scmp.ne.s32.totalorder %s45, %s47
    %p54 = scmp.eq.s32.totalorder %s16, 3
    %p55 = por %p53, %p54
    %p56 = scmp.ne.s32.totalorder %s47, %s48
    %p57 = scmp.eq.s32.totalorder %s16, 0
    %p58 = por %p56, %p57
    %p59 = scmp.ne.s32.totalorder %s47, %s48
    %p60 = scmp.eq.s32.totalorder %s17, 3
    %p61 = por %p59, %p60
    %p63 = scmp.ne.s32.totalorder %s48, %s62
    %p64 = scmp.eq.s32.totalorder %s17, 0
    %p65 = por %p63, %p64
    %s67 = sadd.s32 %s66, 1
    %p70 = scmp.eq.s32.totalorder %s11, 3
    %p71 = scmp.ne.s32.totalorder %s66, %s68
    %p72 = scmp.eq.s32.totalorder %s11, 0
    %p73 = por %p71, %p72
    %p74 = scmp.ne.s32.totalorder %s66, %s68
    %p75 = scmp.eq.s32.totalorder %s16, 3
    %p76 = por %p74, %p75
    %p77 = scmp.ne.s32.totalorder %s68, %s69
    %p78 = scmp.eq.s32.totalorder %s16, 0
    %p79 = por %p77, %p78
    %p80 = scmp.ne.s32.totalorder %s68, %s69
    %p81 = scmp.eq.s32.totalorder %s17, 3
    %p82 = por %p80, %p81
    %p84 = scmp.ne.s32.totalorder %s69, %s83
    %p85 = scmp.eq.s32.totalorder %s17, 0
    %p86 = por %p84, %p85
    %s88 = sadd.s32 %s87, 1
    %p91 = scmp.eq.s32.totalorder %s11, 3
    %p92 = scmp.ne.s32.totalorder %s87, %s89
    %p93 = scmp.eq.s32.totalorder %s11, 0
    %p94 = por %p92, %p93
    %p95 = scmp.ne.s32.totalorder %s87, %s89
    %p96 = scmp.eq.s32.totalorder %s16, 3
    %p97 = por %p95, %p96
    %p98 = scmp.ne.s32.totalorder %s89, %s90
    %p99 = scmp.eq.s32.totalorder %s16, 0
    %p100 = por %p98, %p99
    %p101 = scmp.ne.s32.totalorder %s89, %s90
    %p102 = scmp.eq.s32.totalorder %s17, 3
    %p103 = por %p101, %p102
    %p105 = scmp.ne.s32.totalorder %s90, %s104
    %p106 = scmp.eq.s32.totalorder %s17, 0
    %p107 = por %p105, %p106
    %s109 = sadd.s32 %s108, 1
    %p112 = scmp.eq.s32.totalorder %s11, 3
    %p113 = scmp.ne.s32.totalorder %s108, %s110
    %p114 = scmp.eq.s32.totalorder %s11, 0
    %p115 = por %p113, %p114
    %p116 = scmp.ne.s32.totalorder %s108, %s110
    %p117 = scmp.eq.s32.totalorder %s16, 3
    %p118 = por %p116, %p117
    %p119 = scmp.ne.s32.totalorder %s110, %s111
    %p120 = scmp.eq.s32.totalorder %s16, 0
    %p121 = por %p119, %p120
    %p122 = scmp.ne.s32.totalorder %s110, %s111
    %p123 = scmp.eq.s32.totalorder %s17, 3
    %p124 = por %p122, %p123
    %p126 = scmp.ne.s32.totalorder %s111, %s125
    %p127 = scmp.eq.s32.totalorder %s17, 0
    %p128 = por %p126, %p127
    %s129 = ssub.s32 %s11, %s18
    %p130 = scmp.eq.s32.totalorder %s129, 0
    %s132 = sadd.s32 %s131, 1
    %s133 = scalar_select %p130, %s131, %s132
    %p136 = pneg %p130
    %p137 = scmp.eq.s32.totalorder %s11, 3
    %p138 = por %p136, %p137
    %p139 = scmp.ne.s32.totalorder %s131, %s134
    %p140 = scmp.eq.s32.totalorder %s11, 0
    %p141 = por %p139, %p140
    %p142 = scmp.ne.s32.totalorder %s131, %s134
    %p143 = scmp.eq.s32.totalorder %s16, 3
    %p144 = por %p142, %p143
    %p145 = scmp.ne.s32.totalorder %s134, %s135
    %p146 = scmp.eq.s32.totalorder %s16, 0
    %p147 = por %p145, %p146
    %p148 = scmp.ne.s32.totalorder %s134, %s135
    %p149 = scmp.eq.s32.totalorder %s17, 3
    %p150 = por %p148, %p149
    %p152 = scmp.ne.s32.totalorder %s135, %s151
    %p153 = scmp.eq.s32.totalorder %s17, 0
    %p154 = por %p152, %p153
    %p155 = scmp.le.s32.totalorder 1, %s11
    %p156 = scmp.lt.s32.totalorder %s11, 5
    %p157 = pnand %p155, %p156
    %p158 = pneg %p157
    // Predicated region
    $region9: #{tpu_custom_call.1} parent=5 // pred_check
      _
    $region10: #{tpu_custom_call.1} parent=5 // pred_check_branch
      %160 = sbr.rel (%p157) target = $region12
    $region11: #{tpu_custom_call.1} parent=5 // pred_region
      %s161 = ssub.s32 %s11, 1
      // Predicated region
      $region13: #{tpu_custom_call.1} parent=11 // pred_check
        %p162 = pneg %p58
      $region14: #{tpu_custom_call.1} parent=11 // pred_check_branch
        %164 = sbr.rel (%p162) target = $region16
      $region15: #{tpu_custom_call.1} parent=11 // pred_region
        _
      $region16: #{tpu_custom_call.1} parent=11 // pred_fallthru
        _
      // Predicated region
      $region17: #{tpu_custom_call.1} parent=11 // pred_check
        %p165 = pneg %p79
      $region18: #{tpu_custom_call.1} parent=11 // pred_check_branch
        %167 = sbr.rel (%p165) target = $region20
      $region19: #{tpu_custom_call.1} parent=11 // pred_region
        _
      $region20: #{tpu_custom_call.1} parent=11 // pred_fallthru
        _
      // Predicated region
      $region21: #{tpu_custom_call.1} parent=11 // pred_check
        %p168 = pneg %p100
      $region22: #{tpu_custom_call.1} parent=11 // pred_check_branch
        %170 = sbr.rel (%p168) target = $region24
      $region23: #{tpu_custom_call.1} parent=11 // pred_region
        _
      $region24: #{tpu_custom_call.1} parent=11 // pred_fallthru
        _
      // Predicated region
      $region25: #{tpu_custom_call.1} parent=11 // pred_check
        %p171 = pneg %p121
      $region26: #{tpu_custom_call.1} parent=11 // pred_check_branch
        %173 = sbr.rel (%p171) target = $region28
      $region27: #{tpu_custom_call.1} parent=11 // pred_region
        _
      $region28: #{tpu_custom_call.1} parent=11 // pred_fallthru
        _
    $region12: #{tpu_custom_call.1} parent=5 // pred_fallthru
      _
    %p174 = scmp.lt.s32.totalorder %s11, 4
    // Predicated region
    $region29: #{tpu_custom_call.1} parent=5 // pred_check
      %p175 = pneg %p174
    $region30: #{tpu_custom_call.1} parent=5 // pred_check_branch
      %177 = sbr.rel (%p175) target = $region32
    $region31: #{tpu_custom_call.1} parent=5 // pred_region
      // Predicated region
      $region33: #{tpu_custom_call.1} parent=31 // pred_check
        %p178 = pneg %p31
      $region34: #{tpu_custom_call.1} parent=31 // pred_check_branch
        %180 = sbr.rel (%p178) target = $region36
      $region35: #{tpu_custom_call.1} parent=31 // pred_region
        %p181 = scmp.lt.s32.totalorder %s11, 3
        %s182 = scalar_select %p181, %s11, 3
        %s183 = smul.addr %s182, 18
        %s184 = smul.addr %s183, 8
        %s185 = scalar_lea.vmem %s0, %s184
      $region36: #{tpu_custom_call.1} parent=31 // pred_fallthru
        _
    $region32: #{tpu_custom_call.1} parent=5 // pred_fallthru
      _
    %p186 = scmp.le.s32.totalorder 1, %s11
    %p187 = scmp.lt.s32.totalorder %s11, 5
    %p188 = pnand %p186, %p187
    %p189 = pneg %p188
    // Predicated region
    $region37: #{tpu_custom_call.1} parent=5 // pred_check
      _
    $region38: #{tpu_custom_call.1} parent=5 // pred_check_branch
      %191 = sbr.rel (%p188) target = $region40
    $region39: #{tpu_custom_call.1} parent=5 // pred_region
      %s192 = ssub.s32 %s11, 1
      %p193 = scmp.lt.s32.totalorder %s16, 3
      %s194 = scalar_select %p193, %s16, 3
      %s195 = smul.addr %s194, 18
      %s196 = smul.addr %s195, 8
      %s197 = scalar_lea.vmem %s0, %s196
      %p198 = pneg %p37
      %p199 = pneg %p34
      %p200 = pneg %p58
      %p201 = pneg %p55
      %p202 = pneg %p79
      %p203 = pneg %p76
      %p204 = pneg %p100
      %p205 = pneg %p97
      %p206 = pneg %p121
      %p207 = pneg %p118
      %p208 = pneg %p147
      %p209 = pneg %p144
      %p210 = scmp.lt.s32.totalorder %s16, 3
      %s211 = scalar_select %p210, %s16, 3
      %s212 = smul.addr %s211, 18
      %s213 = smul.addr %s212, 8
      %s214 = scalar_lea.vmem %s5, %s213
      %p215 = scmp.lt.s32.totalorder %s16, 3
      %s216 = scalar_select %p215, %s16, 3
      %s217 = smul.addr %s216, 18
      %s218 = smul.addr %s217, 8
      %s219 = scalar_lea.vmem %s0, %s218
      %p220 = scmp.lt.s32.totalorder %s16, 3
      %s221 = scalar_select %p220, %s16, 3
      %s222 = smul.addr %s221, 18
      %s223 = smul.addr %s222, 8
      %s224 = scalar_lea.vmem %s5, %s223
      %v225 = vld [vmem:[%s219] sm:$0xff]
      %v226 = vld [vmem:[%s219 + $0x8] sm:$0xff]
      %v227 = vld [vmem:[%s219 + $0x10] sm:$0xff]
      %v228 = vld [vmem:[%s219 + $0x18] sm:$0xff]
      %v229 = vld [vmem:[%s219 + $0x20] sm:$0xff]
      %v230 = vld [vmem:[%s219 + $0x28] sm:$0xff]
      %v231 = vld [vmem:[%s219 + $0x30] sm:$0xff]
      %v232 = vld [vmem:[%s219 + $0x38] sm:$0xff]
      %v233 = vld [vmem:[%s219 + $0x40] sm:$0xff]
      %v234 = vld [vmem:[%s219 + $0x48] sm:$0xff]
      %v235 = vld [vmem:[%s219 + $0x50] sm:$0xff]
      %v236 = vld [vmem:[%s219 + $0x58] sm:$0xff]
      %v237 = vld [vmem:[%s219 + $0x60] sm:$0xff]
      %v238 = vld [vmem:[%s219 + $0x68] sm:$0xff]
      %v239 = vld [vmem:[%s219 + $0x70] sm:$0xff]
      %v240 = vld [vmem:[%s219 + $0x78] sm:$0xff]
      %v241 = vld [vmem:[%s219 + $0x80] sm:$0xff]
      %v242 = vld [vmem:[%s219 + $0x88] sm:$0xf]
      %v243 = vld [vmem:[%s1] sm:$0xff]
      %v244 = vld [vmem:[%s1 + $0x8] sm:$0xff]
      %v245 = vld [vmem:[%s1 + $0x10] sm:$0xff]
      %v246 = vld [vmem:[%s1 + $0x18] sm:$0xff]
      %v247 = vld [vmem:[%s1 + $0x20] sm:$0xff]
      %v248 = vld [vmem:[%s2] sm:$0x1]
      %v250 = vperm.slane %v248, 0
      %vm252 = vcmask 326656
      %v254 = vsel %vm252, %v225, 0
      %v257 = vsel %vm252, %v226, 0
      %v260 = vsel %vm252, %v227, 0
      %v263 = vsel %vm252, %v228, 0
      %v266 = vsel %vm252, %v229, 0
      %v269 = vsel %vm252, %v230, 0
      %v272 = vsel %vm252, %v231, 0
      %v275 = vsel %vm252, %v232, 0
      %v278 = vsel %vm252, %v233, 0
      %v281 = vsel %vm252, %v234, 0
      %v284 = vsel %vm252, %v235, 0
      %v287 = vsel %vm252, %v236, 0
      %v290 = vsel %vm252, %v237, 0
      %v293 = vsel %vm252, %v238, 0
      %v296 = vsel %vm252, %v239, 0
      %v299 = vsel %vm252, %v240, 0
      %v302 = vsel %vm252, %v241, 0
      %v305 = vsel %vm252, %v242, 0
      %307 = vmatpush.msra.mxu0 0.0
      %308 = vmatpush.msra.mxu0 0.0
      %309 = vmatpush.msra.mxu0 0.0
      %310 = vmatpush.msra.mxu0 0.0
      %311 = vmatpush.msra.mxu0 0.0
      %312 = vmatpush.msra.mxu0 0.0
      %313 = vmatpush.msra.mxu0 0.0
      %314 = vmatpush.msra.mxu0 0.0
      %315 = vmatpush.msra.mxu0 0.0
      %316 = vmatpush.msra.mxu0 0.0
      %317 = vmatpush.msra.mxu0 0.0
      %318 = vmatpush.msra.mxu0 %v247
      %319 = vmatpush.msra.mxu0 %v246
      %320 = vmatpush.msra.mxu0 %v245
      %321 = vmatpush.msra.mxu0 %v244
      %322 = vmatpush.msra.mxu0 %v243
      %323 = vmatmul.f32.gmra.mxu0 %v254
      %v324 = vpop.f32.mrf.mxu0
      %v325 = vadd.f32 %v250, %v324
      %326 = vmatmul.f32.gmra.mxu0 %v257
      %v327 = vpop.f32.mrf.mxu0
      %v328 = vadd.f32 %v250, %v327
      %329 = vmatmul.f32.gmra.mxu0 %v260
      %v330 = vpop.f32.mrf.mxu0
      %v331 = vadd.f32 %v250, %v330
      %332 = vmatmul.f32.gmra.mxu0 %v263
      %v333 = vpop.f32.mrf.mxu0
      %v334 = vadd.f32 %v250, %v333
      %335 = vmatmul.f32.gmra.mxu0 %v266
      %v336 = vpop.f32.mrf.mxu0
      %v337 = vadd.f32 %v250, %v336
      %338 = vmatmul.f32.gmra.mxu0 %v269
      %v339 = vpop.f32.mrf.mxu0
      %v340 = vadd.f32 %v250, %v339
      %341 = vmatmul.f32.gmra.mxu0 %v272
      %v342 = vpop.f32.mrf.mxu0
      %v343 = vadd.f32 %v250, %v342
      %344 = vmatmul.f32.gmra.mxu0 %v275
      %v345 = vpop.f32.mrf.mxu0
      %v346 = vadd.f32 %v250, %v345
      %347 = vmatmul.f32.gmra.mxu0 %v278
      %v348 = vpop.f32.mrf.mxu0
      %v349 = vadd.f32 %v250, %v348
      %350 = vmatmul.f32.gmra.mxu0 %v281
      %v351 = vpop.f32.mrf.mxu0
      %v352 = vadd.f32 %v250, %v351
      %353 = vmatmul.f32.gmra.mxu0 %v284
      %v354 = vpop.f32.mrf.mxu0
      %v355 = vadd.f32 %v250, %v354
      %356 = vmatmul.f32.gmra.mxu0 %v287
      %v357 = vpop.f32.mrf.mxu0
      %v358 = vadd.f32 %v250, %v357
      %359 = vmatmul.f32.gmra.mxu0 %v290
      %v360 = vpop.f32.mrf.mxu0
      %v361 = vadd.f32 %v250, %v360
      %362 = vmatmul.f32.gmra.mxu0 %v293
      %v363 = vpop.f32.mrf.mxu0
      %v364 = vadd.f32 %v250, %v363
      %365 = vmatmul.f32.gmra.mxu0 %v296
      %v366 = vpop.f32.mrf.mxu0
      %v367 = vadd.f32 %v250, %v366
      %368 = vmatmul.f32.gmra.mxu0 %v299
      %v369 = vpop.f32.mrf.mxu0
      %v370 = vadd.f32 %v250, %v369
      %371 = vmatmul.f32.gmra.mxu0 %v302
      %v372 = vpop.f32.mrf.mxu0
      %v373 = vadd.f32 %v250, %v372
      %374 = vmatmul.f32.gmra.mxu0 %v305
      %v375 = vpop.f32.mrf.mxu0
      %v376 = vadd.f32 %v250, %v375
      %377 = vdwg.mxu0
      %v378 = vmax.f32 %v325, 0.0
      %v379 = vmax.f32 %v328, 0.0
      %v380 = vmax.f32 %v331, 0.0
      %v381 = vmax.f32 %v334, 0.0
      %v382 = vmax.f32 %v337, 0.0
      %v383 = vmax.f32 %v340, 0.0
      %v384 = vmax.f32 %v343, 0.0
      %v385 = vmax.f32 %v346, 0.0
      %v386 = vmax.f32 %v349, 0.0
      %v387 = vmax.f32 %v352, 0.0
      %v388 = vmax.f32 %v355, 0.0
      %v389 = vmax.f32 %v358, 0.0
      %v390 = vmax.f32 %v361, 0.0
      %v391 = vmax.f32 %v364, 0.0
      %v392 = vmax.f32 %v367, 0.0
      %v393 = vmax.f32 %v370, 0.0
      %v394 = vmax.f32 %v373, 0.0
      %v395 = vmax.f32 %v376, 0.0
      %v396 = vadd.f32 %v378, %v379
      %v397 = vadd.f32 %v396, %v380
      %v398 = vadd.f32 %v397, %v381
      %v399 = vadd.f32 %v398, %v382
      %v400 = vadd.f32 %v399, %v383
      %v401 = vadd.f32 %v400, %v384
      %v402 = vadd.f32 %v401, %v385
      %v403 = vadd.f32 %v402, %v386
      %v404 = vadd.f32 %v403, %v387
      %v405 = vadd.f32 %v404, %v388
      %v406 = vadd.f32 %v405, %v389
      %v407 = vadd.f32 %v406, %v390
      %v408 = vadd.f32 %v407, %v391
      %v409 = vadd.f32 %v408, %v392
      %v410 = vadd.f32 %v409, %v393
      %v411 = vadd.f32 %v410, %v394
      %vm412 = vcmask 1043456
      %v413 = vsel %vm412, %v395, 0.0
      %v414 = vadd.f32 %v411, %v413
      %v415 = vrot.slane %v414, 4
      %v416 = vadd.f32 %v414, %v415
      %v417 = vrot.slane %v416, 2
      %v418 = vadd.f32 %v416, %v417
      %v419 = vrot.slane %v418, 1
      %v420 = vadd.f32 %v418, %v419
      %v421 = vrcp.pop 140.0
      %v422 = vmul.f32 140.0, %v421
      %v423 = vsub.f32 1.0, %v422
      %v424 = vmul.f32 %v421, %v423
      %v425 = vadd.f32 %v421, %v424
      %vm426 = vweird.f32 %v421
      %v427 = vsel %vm426, %v421, %v425
      %v428 = vmul.f32 %v420, %v427
      %v429 = vld [vmem:[%s3] sm:$0xff]
      %v430 = vld [vmem:[%s3 + $0x8] sm:$0xff]
      %v431 = vld [vmem:[%s3 + $0x10] sm:$0xff]
      %v432 = vld [vmem:[%s3 + $0x18] sm:$0xff]
      %v433 = vld [vmem:[%s3 + $0x20] sm:$0xff]
      %v434 = vld [vmem:[%s3 + $0x28] sm:$0xff]
      %v435 = vld [vmem:[%s3 + $0x30] sm:$0xff]
      %v436 = vld [vmem:[%s3 + $0x38] sm:$0xff]
      %v437 = vld [vmem:[%s3 + $0x40] sm:$0xff]
      %v438 = vld [vmem:[%s3 + $0x48] sm:$0xff]
      %v439 = vld [vmem:[%s3 + $0x50] sm:$0xff]
      %v440 = vld [vmem:[%s3 + $0x58] sm:$0xff]
      %v441 = vld [vmem:[%s3 + $0x60] sm:$0xff]
      %v442 = vld [vmem:[%s3 + $0x68] sm:$0xff]
      %v443 = vld [vmem:[%s3 + $0x70] sm:$0xff]
      %v444 = vld [vmem:[%s3 + $0x78] sm:$0xff]
      %445 = vmatpush.msra.mxu0 %v444
      %446 = vmatpush.msra.mxu0 %v443
      %447 = vmatpush.msra.mxu0 %v442
      %448 = vmatpush.msra.mxu0 %v441
      %449 = vmatpush.msra.mxu0 %v440
      %450 = vmatpush.msra.mxu0 %v439
      %451 = vmatpush.msra.mxu0 %v438
      %452 = vmatpush.msra.mxu0 %v437
      %453 = vmatpush.msra.mxu0 %v436
      %454 = vmatpush.msra.mxu0 %v435
      %455 = vmatpush.msra.mxu0 %v434
      %456 = vmatpush.msra.mxu0 %v433
      %457 = vmatpush.msra.mxu0 %v432
      %458 = vmatpush.msra.mxu0 %v431
      %459 = vmatpush.msra.mxu0 %v430
      %460 = vmatpush.msra.mxu0 %v429
      %461 = vmatmul.f32.gmra.mxu0 %v428
      %v462 = vpop.f32.mrf.mxu0
      %v463 = vadd.f32 0.0, %v462
      %464 = vdwg.mxu0
      %v465 = vmax.f32 %v463, 0.0
      %v466 = vld [vmem:[%s4] sm:$0xff]
      %vm467 = vcmask 64512
      %v469 = vsel %vm467, %v465, 0
      %471 = vmatpush.msra.mxu0 0.0
      %472 = vmatpush.msra.mxu0 0.0
      %473 = vmatpush.msra.mxu0 0.0
      %474 = vmatpush.msra.mxu0 0.0
      %475 = vmatpush.msra.mxu0 0.0
      %476 = vmatpush.msra.mxu0 0.0
      %477 = vmatpush.msra.mxu0 0.0
      %478 = vmatpush.msra.mxu0 0.0
      %479 = vmatpush.msra.mxu0 0.0
      %480 = vmatpush.msra.mxu0 0.0
      %481 = vmatpush.msra.mxu0 0.0
      %482 = vmatpush.msra.mxu0 0.0
      %483 = vmatpush.msra.mxu0 0.0
      %484 = vmatpush.msra.mxu0 0.0
      %485 = vmatpush.msra.mxu0 0.0
      %486 = vmatpush.msra.mxu0 %v466
      %487 = vmatmul.f32.gmra.mxu0 %v469
      %v488 = vpop.f32.mrf.mxu0
      %v489 = vadd.f32 0.0, %v488
      %490 = vdwg.mxu0
      %v491 = vxor.u32 %v489, 2147483648
      %v492 = vmul.f32 %v491, 1.442695
      %v493 = vpow.pop %v492
      %v494 = vadd.f32 %v493, 1.0
      %v495 = vrcp.pop %v494
      %v496 = vmul.f32 %v494, %v495
      %v497 = vsub.f32 1.0, %v496
      %v498 = vmul.f32 %v495, %v497
      %v499 = vadd.f32 %v495, %v498
      %vm500 = vweird.f32 %v494
      %vm501 = vweird.f32 %v495
      %vm502 = vmor %vm500, %vm501
      %v503 = vsel %vm502, %v495, %v499
      %v504 = vand.u32 2147483647, %v494
      %vm505 = vcmp.eq.f32.partialorder %v504, 8.507059e+37
      %v506 = vand.u32 %v494, 2147483648
      %v507 = vor.u32 1.1754944e-38, %v506
      %v508 = vsel %vm505, %v507, %v503
      %v509 = vmul.f32 1.0, %v508
      %v510 = vperm.slane %v509, 0
      %v511 = vmul.f32 %v378, %v510
      %v512 = vmul.f32 %v379, %v510
      %v513 = vmul.f32 %v380, %v510
      %v514 = vmul.f32 %v381, %v510
      %v515 = vmul.f32 %v382, %v510
      %v516 = vmul.f32 %v383, %v510
      %v517 = vmul.f32 %v384, %v510
      %v518 = vmul.f32 %v385, %v510
      %v519 = vmul.f32 %v386, %v510
      %v520 = vmul.f32 %v387, %v510
      %v521 = vmul.f32 %v388, %v510
      %v522 = vmul.f32 %v389, %v510
      %v523 = vmul.f32 %v390, %v510
      %v524 = vmul.f32 %v391, %v510
      %v525 = vmul.f32 %v392, %v510
      %v526 = vmul.f32 %v393, %v510
      %v527 = vmul.f32 %v394, %v510
      %v528 = vmul.f32 %v395, %v510
      %529 = vst [vmem:[%s224] sm:$0xff] %v511
      %530 = vst [vmem:[%s224 + $0x8] sm:$0xff] %v512
      %531 = vst [vmem:[%s224 + $0x10] sm:$0xff] %v513
      %532 = vst [vmem:[%s224 + $0x18] sm:$0xff] %v514
      %533 = vst [vmem:[%s224 + $0x20] sm:$0xff] %v515
      %534 = vst [vmem:[%s224 + $0x28] sm:$0xff] %v516
      %535 = vst [vmem:[%s224 + $0x30] sm:$0xff] %v517
      %536 = vst [vmem:[%s224 + $0x38] sm:$0xff] %v518
      %537 = vst [vmem:[%s224 + $0x40] sm:$0xff] %v519
      %538 = vst [vmem:[%s224 + $0x48] sm:$0xff] %v520
      %539 = vst [vmem:[%s224 + $0x50] sm:$0xff] %v521
      %540 = vst [vmem:[%s224 + $0x58] sm:$0xff] %v522
      %541 = vst [vmem:[%s224 + $0x60] sm:$0xff] %v523
      %542 = vst [vmem:[%s224 + $0x68] sm:$0xff] %v524
      %543 = vst [vmem:[%s224 + $0x70] sm:$0xff] %v525
      %544 = vst [vmem:[%s224 + $0x78] sm:$0xff] %v526
      %545 = vst [vmem:[%s224 + $0x80] sm:$0xff] %v527
      %546 = vst [vmem:[%s224 + $0x88] sm:$0xf] %v528
      %p547 = scmp.lt.s32.totalorder %s16, 3
      %s548 = scalar_select %p547, %s16, 3
      %s549 = smul.addr %s548, 18
      %s550 = smul.addr %s549, 8
      %s551 = scalar_lea.vmem %s5, %s550
      // Predicated region
      $region41: #{tpu_custom_call.1} parent=39 // pred_check
        %p552 = pneg %p144
      $region42: #{tpu_custom_call.1} parent=39 // pred_check_branch
        %554 = sbr.rel (%p552) target = $region44
      $region43: #{tpu_custom_call.1} parent=39 // pred_region
        _
      $region44: #{tpu_custom_call.1} parent=39 // pred_fallthru
        _
    $region40: #{tpu_custom_call.1} parent=5 // pred_fallthru
      _
    %p555 = scmp.le.s32.totalorder 2, %s11
    // Predicated region
    $region45: #{tpu_custom_call.1} parent=5 // pred_check
      %p556 = pneg %p555
    $region46: #{tpu_custom_call.1} parent=5 // pred_check_branch
      %558 = sbr.rel (%p556) target = $region48
    $region47: #{tpu_custom_call.1} parent=5 // pred_region
      %s559 = ssub.s32 %s11, 2
      // Predicated region
      $region49: #{tpu_custom_call.1} parent=47 // pred_check
        %p560 = pneg %p150
      $region50: #{tpu_custom_call.1} parent=47 // pred_check_branch
        %562 = sbr.rel (%p560) target = $region52
      $region51: #{tpu_custom_call.1} parent=47 // pred_region
        %p563 = scmp.lt.s32.totalorder %s17, 3
        %s564 = scalar_select %p563, %s17, 3
        %s565 = smul.addr %s564, 18
        %s566 = smul.addr %s565, 8
        %s567 = scalar_lea.vmem %s5, %s566
      $region52: #{tpu_custom_call.1} parent=47 // pred_fallthru
        _
    $region48: #{tpu_custom_call.1} parent=5 // pred_fallthru
      _
  $region6: #{tpu_custom_call.1} parent=0 // loop_footer
    %s15 = sadd.s32 1, %s11
  $region7: #{tpu_custom_call.1} parent=0 // loop_footer_branch
    %10 = sbr.rel target = $region3
  $region8: #{tpu_custom_call.1} parent=0 // loop_exit
    _

</llo_original>
